<compile_context>
chip_gen: v5e
topology: v5e:2x2
jax: 0.10.0
libtpu: 0.0.40
codegen_flags: <defaults>
</compile_context>

<pallas_src>
import functools

import jax
import jax.numpy as jnp
from jax import lax
from jax.experimental import pallas as pl
from jax.experimental.pallas import tpu as pltpu

EPS = 1e-5
LANE = 128


# --------------------------------- kernel -----------------------------------

def vae_encoder_kernel(x_ref, w_ref, rows_ref, out_ref):
    """Whole encoder in one kernel.

    x_ref    : (N, in_dim)        f32
    w_ref    : (3*LANE, 2*LANE)   bf16   rows [0:in_dim]      = w1  (in_dim, LANE)
                                         rows [LANE:2*LANE]   = w2  (LANE, LANE)
                                         rows [2*LANE:3*LANE] = [Wmu'|Wlv'] (LANE, 2*LANE)
    rows_ref : (8, 2*LANE)        f32    row0 g1, row1 be1, row2 g2, row3 be2,
                                         row4 = [bmu'|blv']
    out_ref  : (N, 2*LANE)        f32    lanes [0:LANE) -> mu slab, [LANE:2*LANE) -> logvar slab
    """
    n = x_ref.shape[0]
    in_dim = x_ref.shape[1]
    inv_n = 1.0 / n

    rows = rows_ref[...]
    g1, be1 = rows[0:1, :LANE], rows[1:2, :LANE]
    g2, be2 = rows[2:3, :LANE], rows[3:4, :LANE]
    b_head = rows[4:5, :]

    def bn_relu(h, g, be):
        # One-pass train-mode BatchNorm1d (biased variance) fused into scale/shift.
        s = jnp.sum(h, axis=0, keepdims=True)
        ss = jnp.sum(h * h, axis=0, keepdims=True)
        mu = s * inv_n
        var = jnp.maximum(ss * inv_n - mu * mu, 0.0)        # guard f32 rounding
        scale = g * lax.rsqrt(var + EPS)                    # gamma / sqrt(var+eps)
        shift = be - mu * scale                             # beta - mean*scale
        return jnp.maximum(h * scale + shift, 0.0)          # BN + ReLU

    # Layer 1: Linear (bias dropped: no-op under train-mode BN) + BN + ReLU
    h = jnp.dot(x_ref[...].astype(jnp.bfloat16), w_ref[:in_dim, :LANE],
                preferred_element_type=jnp.float32)
    h = bn_relu(h, g1, be1)

    # Layer 2: Linear + BN + ReLU
    h = jnp.dot(h.astype(jnp.bfloat16), w_ref[LANE:2 * LANE, :LANE],
                preferred_element_type=jnp.float32)
    h = bn_relu(h, g2, be2)

    # Fused layer-3 + heads: one 256-wide matmul (w3 folded into fc_mu/fc_logvar).
    out = jnp.dot(h.astype(jnp.bfloat16), w_ref[2 * LANE:3 * LANE, :],
                  preferred_element_type=jnp.float32) + b_head
    out_ref[...] = out.astype(out_ref.dtype)


# -------------------------------- wrapper ------------------------------------

def prepare_params(p):
    """Pack all parameters into two lane-dense slabs (done once, off the hot path).

    * Weight slab (3*LANE, 2*LANE) bf16: zero-padded so padded lanes stay exactly 0
      through every matmul, BN (gamma/beta padded with 0) and ReLU.
    * w3 is algebraically folded into the heads in f32 before the bf16 cast.
    * b1/b2 are intentionally not forwarded (exact no-op under train-mode BN).
    """
    in_dim, h1 = p["w1"].shape
    h2 = p["w2"].shape[1]
    out_dim = p["w_mu"].shape[1]
    assert max(in_dim, h1, h2, out_dim) <= LANE

    # Fold the final MLP Linear into both heads (f32 math).
    w_mu_f = p["w3"] @ p["w_mu"]                    # (h2, out_dim)
    w_lv_f = p["w3"] @ p["w_lv"]
    b_mu_f = p["b3"] @ p["w_mu"] + p["b_mu"]        # (1, out_dim)
    b_lv_f = p["b3"] @ p["w_lv"] + p["b_lv"]

    wslab = jnp.zeros((3 * LANE, 2 * LANE), jnp.float32)
    wslab = wslab.at[:in_dim, :h1].set(p["w1"])
    wslab = wslab.at[LANE:LANE + h1, :h2].set(p["w2"])
    wslab = wslab.at[2 * LANE:2 * LANE + h2, :out_dim].set(w_mu_f)
    wslab = wslab.at[2 * LANE:2 * LANE + h2, LANE:LANE + out_dim].set(w_lv_f)

    rows = jnp.zeros((8, 2 * LANE), jnp.float32)
    rows = rows.at[0, :h1].set(p["g1"][0])
    rows = rows.at[1, :h1].set(p["be1"][0])
    rows = rows.at[2, :h2].set(p["g2"][0])
    rows = rows.at[3, :h2].set(p["be2"][0])
    rows = rows.at[4, :out_dim].set(b_mu_f[0])
    rows = rows.at[4, LANE:LANE + out_dim].set(b_lv_f[0])

    return dict(wslab=wslab.astype(jnp.bfloat16), rows=rows)


@functools.partial(jax.jit, static_argnames=("out_dim",))
def vae_encoder_forward(x, pp, *, out_dim):
    """x: (N, in_dim) f32;  pp: prepare_params(...) output.  Returns (mu, logvar)."""
    n = x.shape[0]
    vmem = pl.BlockSpec(memory_space=pltpu.MemorySpace.VMEM)

    out = pl.pallas_call(
        vae_encoder_kernel,
        out_shape=jax.ShapeDtypeStruct((n, 2 * LANE), jnp.float32),
        in_specs=[vmem, vmem, vmem],
        out_specs=vmem,
    )(x, pp["wslab"], pp["rows"])

    # Slice the real columns off the lane-dense output slab (layout plumbing only).
    return out[:, :out_dim], out[:, LANE:LANE + out_dim]


# ----------------------- synthetic params & references ----------------------

def init_params(key, in_dim, out_dim, hidden_dims):
    """Deterministic synthetic init.  Linear weights stored pre-transposed as (in, out)."""
    dims = [in_dim] + list(hidden_dims) + [out_dim]
    ks = jax.random.split(key, 16)

    def lin(kw, kb, di, do):
        return (jax.random.normal(kw, (di, do), jnp.float32) * 0.2,
                jax.random.normal(kb, (1, do), jnp.float32) * 0.1)

    p = {}
    p["w1"], p["b1"] = lin(ks[0], ks[1], dims[0], dims[1])
    p["g1"] = 1.0 + 0.1 * jax.random.normal(ks[2], (1, dims[1]), jnp.float32)
    p["be1"] = 0.1 * jax.random.normal(ks[3], (1, dims[1]), jnp.float32)
    p["w2"], p["b2"] = lin(ks[4], ks[5], dims[1], dims[2])
    p["g2"] = 1.0 + 0.1 * jax.random.normal(ks[6], (1, dims[2]), jnp.float32)
    p["be2"] = 0.1 * jax.random.normal(ks[7], (1, dims[2]), jnp.float32)
    p["w3"], p["b3"] = lin(ks[8], ks[9], dims[2], dims[3])
    p["w_mu"], p["b_mu"] = lin(ks[10], ks[11], out_dim, out_dim)
    p["w_lv"], p["b_lv"] = lin(ks[12], ks[13], out_dim, out_dim)
    return p


def reference_forward_f32(x, p):
    """Plain-JAX f32 reference mirroring PyTorch semantics (train-mode BN, biases kept)."""
    def bn(h, g, be):
        mu = h.mean(0, keepdims=True)
        var = ((h - mu) ** 2).mean(0, keepdims=True)      # biased, train-mode
        return (h - mu) / jnp.sqrt(var + EPS) * g + be

    h = jnp.maximum(bn(x @ p["w1"] + p["b1"], p["g1"], p["be1"]), 0.0)
    h = jnp.maximum(bn(h @ p["w2"] + p["b2"], p["g2"], p["be2"]), 0.0)
    z = h @ p["w3"] + p["b3"]
    return z @ p["w_mu"] + p["b_mu"], z @ p["w_lv"] + p["b_lv"]


def reference_forward_mixed(x, p):
    """Plain-JAX mirror of the kernel's exact mixed-precision math (tight check):
    bf16 MXU inputs / f32 accumulation, one-pass BN, w3 folded into the heads in f32."""
    bf = jnp.bfloat16

    def dot(a, w):
        return jnp.dot(a.astype(bf), w.astype(bf), preferred_element_type=jnp.float32)

    def bn_relu(h, g, be):
        n = h.shape[0]
        mu = h.sum(0, keepdims=True) / n
        var = jnp.maximum((h * h).sum(0, keepdims=True) / n - mu * mu, 0.0)
        scale = g * lax.rsqrt(var + EPS)
        return jnp.maximum(h * scale + (be - mu * scale), 0.0)

    h = bn_relu(dot(x, p["w1"]), p["g1"], p["be1"])       # pre-BN bias dropped (no-op)
    h = bn_relu(dot(h, p["w2"]), p["g2"], p["be2"])
    w_mu_f = p["w3"] @ p["w_mu"]
    w_lv_f = p["w3"] @ p["w_lv"]
    b_mu_f = p["b3"] @ p["w_mu"] + p["b_mu"]
    b_lv_f = p["b3"] @ p["w_lv"] + p["b_lv"]
    return dot(h, w_mu_f) + b_mu_f, dot(h, w_lv_f) + b_lv_f


# ----------------------------------- main ------------------------------------

if __name__ == "__main__":
    batch = 8            # multiple of 8 sublanes
    in_dim = 32          # input feature dim
    out_dim = 16         # encoder output dim (mu / logvar width)
    hidden_dims = [50, 50]

    key = jax.random.PRNGKey(0)
    kx, kp = jax.random.split(key)
    x = jax.random.normal(kx, (batch, in_dim), jnp.float32)
    params = init_params(kp, in_dim, out_dim, hidden_dims)
    prepped = prepare_params(params)

    mu, logvar = vae_encoder_forward(x, prepped, out_dim=out_dim)
    mu, logvar = jax.block_until_ready((mu, logvar))

    assert mu.shape == (batch, out_dim) and logvar.shape == (batch, out_dim)

    # Tight check against a plain-JAX mirror of the kernel's mixed-precision math.
    mu_mix, lv_mix = reference_forward_mixed(x, params)
    assert jnp.allclose(mu, mu_mix, atol=2e-2, rtol=2e-2), "mismatch vs mixed-precision ref"
    assert jnp.allclose(logvar, lv_mix, atol=2e-2, rtol=2e-2), "mismatch vs mixed-precision ref"

    # Semantic check against the full-f32 PyTorch-style reference (bf16 MXU inputs +
    # the offline w3-fold introduce ~1e-2-level differences at these magnitudes).
    mu_ref, lv_ref = reference_forward_f32(x, params)
    assert jnp.allclose(mu, mu_ref, atol=1e-1, rtol=1e-1), "mismatch vs f32 reference"
    assert jnp.allclose(logvar, lv_ref, atol=1e-1, rtol=1e-1), "mismatch vs f32 reference"

    print("KERNEL_OK")
</pallas_src>

<mosaic_0001>
module attributes {stable_mosaic.version = 11 : i64} {
  func.func @vae_encoder_kernel(%arg0: memref<8x32xf32, #tpu.memory_space<vmem>>, %arg1: memref<384x256xbf16, #tpu.memory_space<vmem>>, %arg2: memref<8x256xf32, #tpu.memory_space<vmem>>, %arg3: memref<8x256xf32, #tpu.memory_space<vmem>>) attributes {dimension_semantics = [], scalar_prefetch = 0 : i64, scratch_operands = 0 : i64, tpu.core_type = #tpu.core_type<tc>} {
    %c0 = arith.constant 0 : index
    %c0_0 = arith.constant 0 : index
    %0 = vector.load %arg2[%c0, %c0_0] : memref<8x256xf32, #tpu.memory_space<vmem>>, vector<8x256xf32>
    %1 = vector.extract_strided_slice %0 {offsets = [0, 0], sizes = [1, 128], strides = [1, 1]} : vector<8x256xf32> to vector<1x128xf32>
    %2 = vector.extract_strided_slice %0 {offsets = [1, 0], sizes = [1, 128], strides = [1, 1]} : vector<8x256xf32> to vector<1x128xf32>
    %3 = vector.extract_strided_slice %0 {offsets = [2, 0], sizes = [1, 128], strides = [1, 1]} : vector<8x256xf32> to vector<1x128xf32>
    %4 = vector.extract_strided_slice %0 {offsets = [3, 0], sizes = [1, 128], strides = [1, 1]} : vector<8x256xf32> to vector<1x128xf32>
    %5 = vector.extract_strided_slice %0 {offsets = [4, 0], sizes = [1, 256], strides = [1, 1]} : vector<8x256xf32> to vector<1x256xf32>
    %c0_1 = arith.constant 0 : index
    %c0_2 = arith.constant 0 : index
    %6 = vector.load %arg0[%c0_1, %c0_2] : memref<8x32xf32, #tpu.memory_space<vmem>>, vector<8x32xf32>
    %7 = arith.truncf %6 : vector<8x32xf32> to vector<8x32xbf16>
    %c0_3 = arith.constant 0 : index
    %c0_4 = arith.constant 0 : index
    %8 = vector.load %arg1[%c0_3, %c0_4] : memref<384x256xbf16, #tpu.memory_space<vmem>>, vector<32x128xbf16>
    %cst = arith.constant dense<0.000000e+00> : vector<8x128xf32>
    %9 = tpu.matmul %7, %8, %cst {dimension_numbers = #tpu.dot_dimension_numbers<[1], [0], [0], [1], [0, 0, 1, 1], [], []>} : vector<8x32xbf16>, vector<32x128xbf16>, vector<8x128xf32> -> vector<8x128xf32>
    %cst_5 = arith.constant dense<0.000000e+00> : vector<128xf32>
    %10 = vector.multi_reduction <add>, %9, %cst_5 [0] : vector<8x128xf32> to vector<128xf32>
    %11 = vector.shape_cast %10 : vector<128xf32> to vector<1x128xf32>
    %12 = arith.mulf %9, %9 : vector<8x128xf32>
    %cst_6 = arith.constant dense<0.000000e+00> : vector<128xf32>
    %13 = vector.multi_reduction <add>, %12, %cst_6 [0] : vector<8x128xf32> to vector<128xf32>
    %14 = vector.shape_cast %13 : vector<128xf32> to vector<1x128xf32>
    %cst_7 = arith.constant 1.250000e-01 : f32
    %15 = vector.broadcast %cst_7 : f32 to vector<1x128xf32>
    %16 = arith.mulf %11, %15 : vector<1x128xf32>
    %cst_8 = arith.constant 1.250000e-01 : f32
    %17 = vector.broadcast %cst_8 : f32 to vector<1x128xf32>
    %18 = arith.mulf %14, %17 : vector<1x128xf32>
    %19 = arith.mulf %16, %16 : vector<1x128xf32>
    %20 = arith.subf %18, %19 : vector<1x128xf32>
    %cst_9 = arith.constant 0.000000e+00 : f32
    %21 = vector.broadcast %cst_9 : f32 to vector<1x128xf32>
    %22 = arith.maximumf %20, %21 : vector<1x128xf32>
    %cst_10 = arith.constant 9.99999974E-6 : f32
    %23 = vector.broadcast %cst_10 : f32 to vector<1x128xf32>
    %24 = arith.addf %22, %23 : vector<1x128xf32>
    %25 = math.rsqrt %24 : vector<1x128xf32>
    %26 = arith.mulf %1, %25 : vector<1x128xf32>
    %27 = arith.mulf %16, %26 : vector<1x128xf32>
    %28 = arith.subf %2, %27 : vector<1x128xf32>
    %29 = vector.broadcast %26 : vector<1x128xf32> to vector<8x128xf32>
    %30 = arith.mulf %9, %29 : vector<8x128xf32>
    %31 = vector.broadcast %28 : vector<1x128xf32> to vector<8x128xf32>
    %32 = arith.addf %30, %31 : vector<8x128xf32>
    %cst_11 = arith.constant 0.000000e+00 : f32
    %33 = vector.broadcast %cst_11 : f32 to vector<8x128xf32>
    %34 = arith.maximumf %32, %33 : vector<8x128xf32>
    %35 = arith.truncf %34 : vector<8x128xf32> to vector<8x128xbf16>
    %c128 = arith.constant 128 : index
    %c0_12 = arith.constant 0 : index
    %36 = vector.load %arg1[%c128, %c0_12] : memref<384x256xbf16, #tpu.memory_space<vmem>>, vector<128x128xbf16>
    %cst_13 = arith.constant dense<0.000000e+00> : vector<8x128xf32>
    %37 = tpu.matmul %35, %36, %cst_13 {dimension_numbers = #tpu.dot_dimension_numbers<[1], [0], [0], [1], [0, 0, 1, 1], [], []>} : vector<8x128xbf16>, vector<128x128xbf16>, vector<8x128xf32> -> vector<8x128xf32>
    %cst_14 = arith.constant dense<0.000000e+00> : vector<128xf32>
    %38 = vector.multi_reduction <add>, %37, %cst_14 [0] : vector<8x128xf32> to vector<128xf32>
    %39 = vector.shape_cast %38 : vector<128xf32> to vector<1x128xf32>
    %40 = arith.mulf %37, %37 : vector<8x128xf32>
    %cst_15 = arith.constant dense<0.000000e+00> : vector<128xf32>
    %41 = vector.multi_reduction <add>, %40, %cst_15 [0] : vector<8x128xf32> to vector<128xf32>
    %42 = vector.shape_cast %41 : vector<128xf32> to vector<1x128xf32>
    %cst_16 = arith.constant 1.250000e-01 : f32
    %43 = vector.broadcast %cst_16 : f32 to vector<1x128xf32>
    %44 = arith.mulf %39, %43 : vector<1x128xf32>
    %cst_17 = arith.constant 1.250000e-01 : f32
    %45 = vector.broadcast %cst_17 : f32 to vector<1x128xf32>
    %46 = arith.mulf %42, %45 : vector<1x128xf32>
    %47 = arith.mulf %44, %44 : vector<1x128xf32>
    %48 = arith.subf %46, %47 : vector<1x128xf32>
    %cst_18 = arith.constant 0.000000e+00 : f32
    %49 = vector.broadcast %cst_18 : f32 to vector<1x128xf32>
    %50 = arith.maximumf %48, %49 : vector<1x128xf32>
    %cst_19 = arith.constant 9.99999974E-6 : f32
    %51 = vector.broadcast %cst_19 : f32 to vector<1x128xf32>
    %52 = arith.addf %50, %51 : vector<1x128xf32>
    %53 = math.rsqrt %52 : vector<1x128xf32>
    %54 = arith.mulf %3, %53 : vector<1x128xf32>
    %55 = arith.mulf %44, %54 : vector<1x128xf32>
    %56 = arith.subf %4, %55 : vector<1x128xf32>
    %57 = vector.broadcast %54 : vector<1x128xf32> to vector<8x128xf32>
    %58 = arith.mulf %37, %57 : vector<8x128xf32>
    %59 = vector.broadcast %56 : vector<1x128xf32> to vector<8x128xf32>
    %60 = arith.addf %58, %59 : vector<8x128xf32>
    %cst_20 = arith.constant 0.000000e+00 : f32
    %61 = vector.broadcast %cst_20 : f32 to vector<8x128xf32>
    %62 = arith.maximumf %60, %61 : vector<8x128xf32>
    %63 = arith.truncf %62 : vector<8x128xf32> to vector<8x128xbf16>
    %c256 = arith.constant 256 : index
    %c0_21 = arith.constant 0 : index
    %64 = vector.load %arg1[%c256, %c0_21] : memref<384x256xbf16, #tpu.memory_space<vmem>>, vector<128x256xbf16>
    %cst_22 = arith.constant dense<0.000000e+00> : vector<8x256xf32>
    %65 = tpu.matmul %63, %64, %cst_22 {dimension_numbers = #tpu.dot_dimension_numbers<[1], [0], [0], [1], [0, 0, 1, 1], [], []>} : vector<8x128xbf16>, vector<128x256xbf16>, vector<8x256xf32> -> vector<8x256xf32>
    %66 = vector.broadcast %5 : vector<1x256xf32> to vector<8x256xf32>
    %67 = arith.addf %65, %66 : vector<8x256xf32>
    %c0_23 = arith.constant 0 : index
    %c0_24 = arith.constant 0 : index
    %68 = vector.load %arg3[%c0_23, %c0_24] : memref<8x256xf32, #tpu.memory_space<vmem>>, vector<8x256xf32>
    tpu.vector_store %arg3[%c0_23, %c0_24], %67 {strides = array<i32>} : memref<8x256xf32, #tpu.memory_space<vmem>>, vector<8x256xf32>,
    return
  }
}

</mosaic_0001>

<llo_original>
// kernel: vae_encoder_forward.1
$region0: #{vae_encoder_forward.1}
  #allocation0 [shape = 'u32[]', space=smem, size = 0x4, offset = 0x4, fixed_abs, tag = 'smem constant byte address 0x4 - core index']
  #allocation1 [shape = 'u32[72,128]{1,0:T(1,128)}', space=vmem, size = 0x9000, scoped, tag = 'internal scratch']
  %s0 = inlined_call_operand.hbm [shape: f32[8,32], index: 0, kind: input, shape index: {}]
  %s1 = inlined_call_operand.hbm [shape: bf16[384,256], index: 1, kind: input, shape index: {}]
  %s2 = inlined_call_operand.hbm [shape: f32[8,256], index: 2, kind: input, shape index: {}]
  %s3 = inlined_call_operand.vmem [shape: f32[8,256], index: 3, kind: output, shape index: {}]
  %s4 = sld [smem:[#allocation0]]
  $region34: #{vae_encoder_forward.1} parent=0
    _
  %s6 = ssub.s32 1, %s4
  %s7 = scalar_select 0, %s6, %s4
  $region1: #{vae_encoder_forward.1} parent=0
    #allocation2 [shape = 'u8[4096]{0}', space=vmem, size = 0x1000, scoped, tag = 'input window, operand 0, single buffered']
    #allocation3 [shape = 's32[1]{0}', space=sflag, size = 0x4, scoped, tag = 'scoped memory for vae_encoder_forward.1']
    #allocation4 [shape = 'u8[196608]{0}', space=vmem, size = 0x30000, scoped, tag = 'input window, operand 1, single buffered']
    #allocation5 [shape = 's32[1]{0}', space=sflag, size = 0x4, scoped, tag = 'scoped memory for vae_encoder_forward.1']
    #allocation6 [shape = 'u8[8192]{0}', space=vmem, size = 0x2000, scoped, tag = 'input window, operand 2, single buffered']
    %8 = vsyncpa [#allocation3], 0
    %9 = vsyncpa [#allocation5], 0
    // Predicated region
    $region2: #{vae_encoder_forward.1} parent=1 // pred_check
      _
    $region3: #{vae_encoder_forward.1} parent=1 // pred_check_branch
      %11 = sbr.rel (0) target = $region5
    $region4: #{vae_encoder_forward.1} parent=1 // pred_region
      %13 = vsyncadd [#allocation3], 0
      %s15 = sshll.u32 %s0, 4
      %s16 = int_to_ptr.hbm [resolvable:$true] %s15
      %s17 = sshll.u32 [#allocation2], 4
      %s18 = int_to_ptr.vmem [resolvable:$true] %s17
      %20 = dma.hbm_to_vmem [thread:$0]  %s16, 128, %s18, [#allocation3]
    $region5: #{vae_encoder_forward.1} parent=1 // pred_fallthru
      _
    // Predicated region
    $region6: #{vae_encoder_forward.1} parent=1 // pred_check
      _
    $region7: #{vae_encoder_forward.1} parent=1 // pred_check_branch
      %22 = sbr.rel (0) target = $region9
    $region8: #{vae_encoder_forward.1} parent=1 // pred_region
      %24 = vsyncadd [#allocation5], 0
      %s25 = sshll.u32 %s1, 4
      %s26 = int_to_ptr.hbm [resolvable:$true] %s25
      %s27 = sshll.u32 [#allocation4], 4
      %s28 = int_to_ptr.vmem [resolvable:$true] %s27
      %33 = dma.hbm_to_vmem [thread:$0]  %s26, 6144, %s28, [#allocation5], 128, 128, 8
    $region9: #{vae_encoder_forward.1} parent=1 // pred_fallthru
      _
    // Predicated region
    $region10: #{vae_encoder_forward.1} parent=1 // pred_check
      _
    $region11: #{vae_encoder_forward.1} parent=1 // pred_check_branch
      %35 = sbr.rel (0) target = $region13
    $region12: #{vae_encoder_forward.1} parent=1 // pred_region
      %37 = vsyncadd [#allocation5], 0
      %s39 = sshll.u32 %s2, 4
      %s40 = int_to_ptr.hbm [resolvable:$true] %s39
      %s41 = sshll.u32 [#allocation6], 4
      %s42 = int_to_ptr.vmem [resolvable:$true] %s41
      %44 = dma.hbm_to_vmem [thread:$0]  %s40, 256, %s42, [#allocation5]
    $region13: #{vae_encoder_forward.1} parent=1 // pred_fallthru
      _
    // Predicated region
    $region14: #{vae_encoder_forward.1} parent=1 // pred_check
      _
    $region15: #{vae_encoder_forward.1} parent=1 // pred_check_branch
      %46 = sbr.rel (0) target = $region17
    $region16: #{vae_encoder_forward.1} parent=1 // pred_region
      %48 = dma.done [#allocation3], 128
    $region17: #{vae_encoder_forward.1} parent=1 // pred_fallthru
      _
    // Predicated region
    $region18: #{vae_encoder_forward.1} parent=1 // pred_check
      _
    $region19: #{vae_encoder_forward.1} parent=1 // pred_check_branch
      %50 = sbr.rel (0) target = $region21
    $region20: #{vae_encoder_forward.1} parent=1 // pred_region
      %52 = dma.done [#allocation5], 6144
    $region21: #{vae_encoder_forward.1} parent=1 // pred_fallthru
      _
    // Predicated region
    $region22: #{vae_encoder_forward.1} parent=1 // pred_check
      _
    $region23: #{vae_encoder_forward.1} parent=1 // pred_check_branch
      %54 = sbr.rel (0) target = $region25
    $region24: #{vae_encoder_forward.1} parent=1 // pred_region
      %56 = dma.done [#allocation5], 256
    $region25: #{vae_encoder_forward.1} parent=1 // pred_fallthru
      _
    %v58 = vld [vmem:[#allocation6] sm:$0xff]
    %v59 = vld [vmem:[#allocation6 + $0x8] sm:$0xff]
    %v60 = vld [vmem:[#allocation2] sm:$0xff]
    %v61 = vpack.c.bf16 %v60, %v60
    %v62 = vld [vmem:[#allocation4] sm:$0xf]
    %v63 = vld [vmem:[#allocation4 + $0x8] sm:$0xf]
    %v64 = vld [vmem:[#allocation4 + $0x10] sm:$0xf]
    %v65 = vld [vmem:[#allocation4 + $0x18] sm:$0xf]
    %v70 = vunpack.c.l.b16 %v62
    %v71 = vunpack.c.l.b16 %v63
    %v72 = vunpack.c.l.b16 %v64
    %v73 = vunpack.c.l.b16 %v65
    %v74 = vpack.c.b16 %v71, %v70
    %v75 = vpack.c.b16 %v73, %v72
    %vm78 = vcmask 261120
    %v80 = vsel %vm78, %v61, 0
    %82 = vmatpush.bf16.msra.mxu0 0
    %83 = vmatpush.bf16.msra.mxu0 0
    %84 = vmatpush.bf16.msra.mxu0 0
    %85 = vmatpush.bf16.msra.mxu0 0
    %86 = vmatpush.bf16.msra.mxu0 0
    %87 = vmatpush.bf16.msra.mxu0 0
    %88 = vmatpush.bf16.msra.mxu0 %v75
    %89 = vmatpush.bf16.msra.mxu0 %v74
    %90 = vmatmul.bf16.gmra.mxu0 %v80
    %v91 = vpop.f32.mrf.mxu0
    %v92 = vadd.f32 0.0, %v91
    %v93 = vpop.f32.mrf.mxu0
    %94 = vdwg.mxu0
    %v95 = vrot.slane %v92, 4
    %v96 = vadd.f32 %v92, %v95
    %v97 = vrot.slane %v96, 2
    %v98 = vadd.f32 %v96, %v97
    %v99 = vrot.slane %v98, 1
    %v100 = vadd.f32 %v98, %v99
    %v101 = vmul.f32 %v92, %v92
    %v102 = vrot.slane %v101, 4
    %v103 = vadd.f32 %v101, %v102
    %v104 = vrot.slane %v103, 2
    %v105 = vadd.f32 %v103, %v104
    %v106 = vrot.slane %v105, 1
    %v107 = vadd.f32 %v105, %v106
    %v108 = vmul.f32 %v100, 0.125
    %v109 = vmul.f32 %v107, 0.125
    %v110 = vmul.f32 %v108, %v108
    %v111 = vsub.f32 %v109, %v110
    %v112 = vmax.f32 %v111, 0.0
    %v113 = vadd.f32 %v112, 1e-05
    %v114 = vrsqrt.pop %v113
    %v115 = vmul.f32 %v114, %v113
    %v116 = vmul.f32 %v115, %v114
    %v117 = vmul.f32 0.5, %v116
    %v118 = vsub.f32 1.5, %v117
    %v119 = vmul.f32 %v114, %v118
    %vm120 = vweird.f32 %v113
    %vm121 = vweird.f32 %v114
    %vm122 = vmor %vm120, %vm121
    %v123 = vsel %vm122, %v114, %v119
    %v124 = vmul.f32 %v58, %v123
    %v125 = vmul.f32 %v108, %v124
    %v127 = vrot.slane %v125, 7
    %v129 = vsub.f32 %v58, %v127
    %v130 = vperm.slane %v124, 0
    %v131 = vmul.f32 %v92, %v130
    %v132 = vperm.slane %v129, 1
    %v133 = vadd.f32 %v131, %v132
    %v134 = vmax.f32 %v133, 0.0
    %v135 = vpack.c.bf16 %v134, %v134
    %v136 = vld [vmem:[#allocation4 + $0x80] sm:$0xf]
    %v137 = vld [vmem:[#allocation4 + $0x88] sm:$0xf]
    %v138 = vld [vmem:[#allocation4 + $0x90] sm:$0xf]
    %v139 = vld [vmem:[#allocation4 + $0x98] sm:$0xf]
    %v140 = vld [vmem:[#allocation4 + $0xa0] sm:$0xf]
    %v141 = vld [vmem:[#allocation4 + $0xa8] sm:$0xf]
    %v142 = vld [vmem:[#allocation4 + $0xb0] sm:$0xf]
    %v143 = vld [vmem:[#allocation4 + $0xb8] sm:$0xf]
    %v144 = vld [vmem:[#allocation4 + $0xc0] sm:$0xf]
    %v145 = vld [vmem:[#allocation4 + $0xc8] sm:$0xf]
    %v146 = vld [vmem:[#allocation4 + $0xd0] sm:$0xf]
    %v147 = vld [vmem:[#allocation4 + $0xd8] sm:$0xf]
    %v148 = vld [vmem:[#allocation4 + $0xe0] sm:$0xf]
    %v149 = vld [vmem:[#allocation4 + $0xe8] sm:$0xf]
    %v150 = vld [vmem:[#allocation4 + $0xf0] sm:$0xf]
    %v151 = vld [vmem:[#allocation4 + $0xf8] sm:$0xf]
    %v168 = vunpack.c.l.b16 %v136
    %v169 = vunpack.c.l.b16 %v137
    %v170 = vunpack.c.l.b16 %v138
    %v171 = vunpack.c.l.b16 %v139
    %v172 = vunpack.c.l.b16 %v140
    %v173 = vunpack.c.l.b16 %v141
    %v174 = vunpack.c.l.b16 %v142
    %v175 = vunpack.c.l.b16 %v143
    %v176 = vunpack.c.l.b16 %v144
    %v177 = vunpack.c.l.b16 %v145
    %v178 = vunpack.c.l.b16 %v146
    %v179 = vunpack.c.l.b16 %v147
    %v180 = vunpack.c.l.b16 %v148
    %v181 = vunpack.c.l.b16 %v149
    %v182 = vunpack.c.l.b16 %v150
    %v183 = vunpack.c.l.b16 %v151
    %v184 = vpack.c.b16 %v169, %v168
    %v185 = vpack.c.b16 %v171, %v170
    %v186 = vpack.c.b16 %v173, %v172
    %v187 = vpack.c.b16 %v175, %v174
    %v188 = vpack.c.b16 %v177, %v176
    %v189 = vpack.c.b16 %v179, %v178
    %v190 = vpack.c.b16 %v181, %v180
    %v191 = vpack.c.b16 %v183, %v182
    %200 = vmatpush.bf16.msra.mxu0 %v191
    %201 = vmatpush.bf16.msra.mxu0 %v190
    %202 = vmatpush.bf16.msra.mxu0 %v189
    %203 = vmatpush.bf16.msra.mxu0 %v188
    %204 = vmatpush.bf16.msra.mxu0 %v187
    %205 = vmatpush.bf16.msra.mxu0 %v186
    %206 = vmatpush.bf16.msra.mxu0 %v185
    %207 = vmatpush.bf16.msra.mxu0 %v184
    %208 = vmatmul.bf16.gmra.mxu0 %v135
    %v209 = vpop.f32.mrf.mxu0
    %v210 = vadd.f32 0.0, %v209
    %v211 = vpop.f32.mrf.mxu0
    %212 = vdwg.mxu0
    %v213 = vrot.slane %v210, 4
    %v214 = vadd.f32 %v210, %v213
    %v215 = vrot.slane %v214, 2
    %v216 = vadd.f32 %v214, %v215
    %v217 = vrot.slane %v216, 1
    %v218 = vadd.f32 %v216, %v217
    %v219 = vmul.f32 %v210, %v210
    %v220 = vrot.slane %v219, 4
    %v221 = vadd.f32 %v219, %v220
    %v222 = vrot.slane %v221, 2
    %v223 = vadd.f32 %v221, %v222
    %v224 = vrot.slane %v223, 1
    %v225 = vadd.f32 %v223, %v224
    %v226 = vmul.f32 %v218, 0.125
    %v227 = vmul.f32 %v225, 0.125
    %v228 = vmul.f32 %v226, %v226
    %v229 = vsub.f32 %v227, %v228
    %v230 = vmax.f32 %v229, 0.0
    %v231 = vadd.f32 %v230, 1e-05
    %v232 = vrsqrt.pop %v231
    %v233 = vmul.f32 %v232, %v231
    %v234 = vmul.f32 %v233, %v232
    %v235 = vmul.f32 0.5, %v234
    %v236 = vsub.f32 1.5, %v235
    %v237 = vmul.f32 %v232, %v236
    %vm238 = vweird.f32 %v231
    %vm239 = vweird.f32 %v232
    %vm240 = vmor %vm238, %vm239
    %v241 = vsel %vm240, %v232, %v237
    %v242 = vmul.f32 %v58, %v241
    %v243 = vmul.f32 %v226, %v242
    %v245 = vrot.slane %v243, 7
    %v247 = vsub.f32 %v58, %v245
    %v248 = vperm.slane %v242, 2
    %v249 = vmul.f32 %v210, %v248
    %v250 = vperm.slane %v247, 3
    %v251 = vadd.f32 %v249, %v250
    %v252 = vmax.f32 %v251, 0.0
    %v253 = vpack.c.bf16 %v252, %v252
    %v254 = vld [vmem:[#allocation4 + $0x100] sm:$0xff]
    %v255 = vld [vmem:[#allocation4 + $0x108] sm:$0xff]
    %v256 = vld [vmem:[#allocation4 + $0x110] sm:$0xff]
    %v257 = vld [vmem:[#allocation4 + $0x118] sm:$0xff]
    %v258 = vld [vmem:[#allocation4 + $0x120] sm:$0xff]
    %v259 = vld [vmem:[#allocation4 + $0x128] sm:$0xff]
    %v260 = vld [vmem:[#allocation4 + $0x130] sm:$0xff]
    %v261 = vld [vmem:[#allocation4 + $0x138] sm:$0xff]
    %v262 = vld [vmem:[#allocation4 + $0x140] sm:$0xff]
    %v263 = vld [vmem:[#allocation4 + $0x148] sm:$0xff]
    %v264 = vld [vmem:[#allocation4 + $0x150] sm:$0xff]
    %v265 = vld [vmem:[#allocation4 + $0x158] sm:$0xff]
    %v266 = vld [vmem:[#allocation4 + $0x160] sm:$0xff]
    %v267 = vld [vmem:[#allocation4 + $0x168] sm:$0xff]
    %v268 = vld [vmem:[#allocation4 + $0x170] sm:$0xff]
    %v269 = vld [vmem:[#allocation4 + $0x178] sm:$0xff]
    %v270 = vperm.slane %v58, 4
    %v271 = vperm.slane %v59, 4
    %v288 = vunpack.c.l.b16 %v254
    %v289 = vunpack.c.h.b16 %v254
    %v290 = vunpack.c.l.b16 %v255
    %v291 = vunpack.c.h.b16 %v255
    %v292 = vunpack.c.l.b16 %v256
    %v293 = vunpack.c.h.b16 %v256
    %v294 = vunpack.c.l.b16 %v257
    %v295 = vunpack.c.h.b16 %v257
    %v296 = vunpack.c.l.b16 %v258
    %v297 = vunpack.c.h.b16 %v258
    %v298 = vunpack.c.l.b16 %v259
    %v299 = vunpack.c.h.b16 %v259
    %v300 = vunpack.c.l.b16 %v260
    %v301 = vunpack.c.h.b16 %v260
    %v302 = vunpack.c.l.b16 %v261
    %v303 = vunpack.c.h.b16 %v261
    %v304 = vunpack.c.l.b16 %v262
    %v305 = vunpack.c.h.b16 %v262
    %v306 = vunpack.c.l.b16 %v263
    %v307 = vunpack.c.h.b16 %v263
    %v308 = vunpack.c.l.b16 %v264
    %v309 = vunpack.c.h.b16 %v264
    %v310 = vunpack.c.l.b16 %v265
    %v311 = vunpack.c.h.b16 %v265
    %v312 = vunpack.c.l.b16 %v266
    %v313 = vunpack.c.h.b16 %v266
    %v314 = vunpack.c.l.b16 %v267
    %v315 = vunpack.c.h.b16 %v267
    %v316 = vunpack.c.l.b16 %v268
    %v317 = vunpack.c.h.b16 %v268
    %v318 = vunpack.c.l.b16 %v269
    %v319 = vunpack.c.h.b16 %v269
    %v320 = vpack.c.b16 %v290, %v288
    %v321 = vpack.c.b16 %v291, %v289
    %v322 = vpack.c.b16 %v294, %v292
    %v323 = vpack.c.b16 %v295, %v293
    %v324 = vpack.c.b16 %v298, %v296
    %v325 = vpack.c.b16 %v299, %v297
    %v326 = vpack.c.b16 %v302, %v300
    %v327 = vpack.c.b16 %v303, %v301
    %v328 = vpack.c.b16 %v306, %v304
    %v329 = vpack.c.b16 %v307, %v305
    %v330 = vpack.c.b16 %v310, %v308
    %v331 = vpack.c.b16 %v311, %v309
    %v332 = vpack.c.b16 %v314, %v312
    %v333 = vpack.c.b16 %v315, %v313
    %v334 = vpack.c.b16 %v318, %v316
    %v335 = vpack.c.b16 %v319, %v317
    %352 = vmatpush.bf16.msra.mxu0 %v334
    %353 = vmatpush.bf16.msra.mxu0 %v332
    %354 = vmatpush.bf16.msra.mxu0 %v330
    %355 = vmatpush.bf16.msra.mxu0 %v328
    %356 = vmatpush.bf16.msra.mxu0 %v326
    %357 = vmatpush.bf16.msra.mxu0 %v324
    %358 = vmatpush.bf16.msra.mxu0 %v322
    %359 = vmatpush.bf16.msra.mxu0 %v320
    %360 = vmatmul.bf16.gmra.mxu0 %v253
    %v361 = vpop.f32.mrf.mxu0
    %v362 = vadd.f32 %v270, %v361
    %v363 = vpop.f32.mrf.mxu0
    %364 = vdwg.mxu0
    %365 = vmatpush.bf16.msra.mxu0 %v335
    %366 = vmatpush.bf16.msra.mxu0 %v333
    %367 = vmatpush.bf16.msra.mxu0 %v331
    %368 = vmatpush.bf16.msra.mxu0 %v329
    %369 = vmatpush.bf16.msra.mxu0 %v327
    %370 = vmatpush.bf16.msra.mxu0 %v325
    %371 = vmatpush.bf16.msra.mxu0 %v323
    %372 = vmatpush.bf16.msra.mxu0 %v321
    %373 = vmatmul.bf16.gmra.mxu0 %v253
    %v374 = vpop.f32.mrf.mxu0
    %v375 = vadd.f32 %v271, %v374
    %v376 = vpop.f32.mrf.mxu0
    %377 = vdwg.mxu0
    %378 = vst [vmem:[%s3] sm:$0xff] %v362
    %379 = vst [vmem:[%s3 + $0x8] sm:$0xff] %v375
    // Predicated region
    $region26: #{vae_encoder_forward.1} parent=1 // pred_check
      _
    $region27: #{vae_encoder_forward.1} parent=1 // pred_check_branch
      %381 = sbr.rel (0) target = $region29
    $region28: #{vae_encoder_forward.1} parent=1 // pred_region
      _
    $region29: #{vae_encoder_forward.1} parent=1 // pred_fallthru
      _
    // Predicated region
    $region30: #{vae_encoder_forward.1} parent=1 // pred_check
      _
    $region31: #{vae_encoder_forward.1} parent=1 // pred_check_branch
      %383 = sbr.rel (0) target = $region33
    $region32: #{vae_encoder_forward.1} parent=1 // pred_region
      _
    $region33: #{vae_encoder_forward.1} parent=1 // pred_fallthru
      _
    %384 = vsyncpa [#allocation3], 1
    %385 = vsyncpa [#allocation5], 1

</llo_original>
